<compile_context>
chip_gen: v5e
topology: v5e:2x2
jax: 0.10.0
libtpu: 0.0.40
codegen_flags: <defaults>
</compile_context>

<pallas_src>
import functools

import jax
import jax.numpy as jnp
from jax.experimental import pallas as pl
from jax.experimental.pallas import tpu as pltpu

EPS = 1e-6
LANES = 128
# Target bytes for one (B, ts, 128) f32 input block.  Three inputs, double
# buffered -> ~12 MiB of VMEM: safe on v5e / v6e / v7x.
_TARGET_BLOCK_BYTES = 2 * 1024 * 1024
_VMEM_LIMIT_BYTES = 32 * 1024 * 1024


def _dice_partial_kernel(p_ref, g_ref, m_ref, a_ref, b_ref, c_ref, *,
                         rows_total, block_rows, ragged):
    """One grid step: masked products + lane-dense per-block partial sums."""
    mask = m_ref[...].astype(jnp.float32)
    p = p_ref[...].astype(jnp.float32) * mask
    g = g_ref[...].astype(jnp.float32) * mask

    if ragged:
        # The final block may extend past R rows; zero the out-of-range rows.
        # Use where (select), not multiply, so garbage (possibly NaN) in the
        # unwritten part of the VMEM buffer cannot propagate into the sums.
        k = pl.program_id(0)
        row = jax.lax.broadcasted_iota(jnp.int32, (block_rows, LANES), 0)
        valid = (row < (rows_total - k * block_rows))[None, :, :]
        p = jnp.where(valid, p, 0.0)
        g = jnp.where(valid, g, 0.0)

    a_ref[...] = jnp.sum(p * g, axis=1)[None]   # (1, B, 128)
    b_ref[...] = jnp.sum(p * p, axis=1)[None]
    c_ref[...] = jnp.sum(g * g, axis=1)[None]


def dice_loss_pallas(pre_score, gt_score, train_mask, eps=EPS,
                     max_block_rows=None):
    """DiceLoss forward.  Inputs are same-shape NCHW (or any >=2-D) tensors."""
    B = pre_score.shape[0]
    N = 1
    for s in pre_score.shape[1:]:
        N *= s

    p = pre_score.reshape(B, N)
    g = gt_score.reshape(B, N)
    m = train_mask.reshape(B, N)

    # Lane-dense layout (B, R, 128).  For N % 128 == 0 (typical C*H*W) the
    # reshape is free.  Otherwise pad the few trailing lanes with zeros
    # (zero pad -> zero products -> reductions unaffected).
    pad = (-N) % LANES
    if pad:
        # TODO(synk): rare path (N not a multiple of 128) costs one extra HBM
        # copy of the inputs.
        p = jnp.pad(p, ((0, 0), (0, pad)))
        g = jnp.pad(g, ((0, 0), (0, pad)))
        m = jnp.pad(m, ((0, 0), (0, pad)))
    R = (N + pad) // LANES
    p = p.reshape(B, R, LANES)
    g = g.reshape(B, R, LANES)
    m = m.reshape(B, R, LANES)

    # Tile the R axis with big blocks; ts must be a multiple of 8 (sublane
    # tiling) unless it spans the full axis.
    row_bytes = B * LANES * 4
    ts = max(8, (_TARGET_BLOCK_BYTES // row_bytes) // 8 * 8)
    if max_block_rows is not None:  # test/benchmark override
        ts = max(8, (max_block_rows // 8) * 8)
    if R <= ts:
        ts = R                      # single full block, no ragged tail
        nb = 1
        ragged = False
    else:
        nb = -(-R // ts)
        ragged = (R % ts) != 0

    kernel = functools.partial(
        _dice_partial_kernel, rows_total=R, block_rows=ts, ragged=ragged)

    in_spec = pl.BlockSpec((B, ts, LANES), lambda k: (0, k, 0))
    out_spec = pl.BlockSpec((1, B, LANES), lambda k: (k, 0, 0))
    part_shape = jax.ShapeDtypeStruct((nb, B, LANES), jnp.float32)

    a_p, b_p, c_p = pl.pallas_call(
        kernel,
        out_shape=(part_shape, part_shape, part_shape),
        grid_spec=pltpu.PrefetchScalarGridSpec(
            num_scalar_prefetch=0,
            grid=(nb,),
            in_specs=[in_spec, in_spec, in_spec],
            out_specs=(out_spec, out_spec, out_spec),
        ),
        compiler_params=pltpu.CompilerParams(
            dimension_semantics=("parallel",),
            vmem_limit_bytes=_VMEM_LIMIT_BYTES,
        ),
    )(p, g, m)

    # Tiny finalize (nb is single-digit to low-tens by construction).
    a = jnp.sum(a_p, axis=(0, 2))
    b = jnp.sum(b_p, axis=(0, 2)) + eps
    c = jnp.sum(c_p, axis=(0, 2)) + eps
    d = 2.0 * a / (b + c)
    return 1.0 - jnp.mean(d)


def dice_loss_ref(pre_score, gt_score, train_mask, eps=EPS):
    B = pre_score.shape[0]
    p = pre_score.reshape(B, -1) * train_mask.reshape(B, -1)
    g = gt_score.reshape(B, -1) * train_mask.reshape(B, -1)
    a = jnp.sum(p * g, axis=1)
    b = jnp.sum(p * p, axis=1) + eps
    c = jnp.sum(g * g, axis=1) + eps
    d = 2.0 * a / (b + c)
    return 1.0 - jnp.mean(d)


def _make_inputs(key, shape):
    k1, k2, k3 = jax.random.split(key, 3)
    pre = jax.nn.sigmoid(jax.random.normal(k1, shape, jnp.float32))
    gt = (jax.random.uniform(k2, shape) > 0.5).astype(jnp.float32)
    msk = (jax.random.uniform(k3, shape) > 0.2).astype(jnp.float32)
    return pre, gt, msk


if __name__ == "__main__":
    # Case 1: main path — N % 128 == 0, single large block.
    pre, gt, msk = _make_inputs(jax.random.PRNGKey(0), (2, 4, 16, 16))
    loss = jax.block_until_ready(dice_loss_pallas(pre, gt, msk))
    ref = dice_loss_ref(pre, gt, msk)
    assert jnp.allclose(loss, ref, rtol=1e-5, atol=1e-6), (loss, ref)

    # Case 2: multi-block grid with a ragged final block (in-kernel masking).
    pre, gt, msk = _make_inputs(jax.random.PRNGKey(1), (2, 3, 20, 32))
    loss = jax.block_until_ready(dice_loss_pallas(pre, gt, msk, max_block_rows=8))
    ref = dice_loss_ref(pre, gt, msk)
    assert jnp.allclose(loss, ref, rtol=1e-5, atol=1e-6), (loss, ref)

    # Case 3: N not a multiple of 128 (minimal zero-pad fallback).
    pre, gt, msk = _make_inputs(jax.random.PRNGKey(2), (2, 3, 10, 10))
    loss = jax.block_until_ready(dice_loss_pallas(pre, gt, msk))
    ref = dice_loss_ref(pre, gt, msk)
    assert jnp.allclose(loss, ref, rtol=1e-5, atol=1e-6), (loss, ref)

    print("KERNEL_OK")
</pallas_src>

<mosaic_0001>
module attributes {stable_mosaic.version = 11 : i64} {
  func.func @_dice_partial_kernel(%arg0: i32, %arg1: memref<2x8x128xf32, #tpu.memory_space<vmem>>, %arg2: memref<2x8x128xf32, #tpu.memory_space<vmem>>, %arg3: memref<2x8x128xf32, #tpu.memory_space<vmem>>, %arg4: memref<1x2x128xf32, #tpu.memory_space<vmem>>, %arg5: memref<1x2x128xf32, #tpu.memory_space<vmem>>, %arg6: memref<1x2x128xf32, #tpu.memory_space<vmem>>) attributes {dimension_semantics = [#tpu.dimension_semantics<parallel>], iteration_bounds = array<i64: 1>, scalar_prefetch = 0 : i64, scratch_operands = 0 : i64, tpu.core_type = #tpu.core_type<tc>, window_params = [{transform_indices = @transform_0, window_bounds = array<i64: 2, 8, 128>}, {transform_indices = @transform_1, window_bounds = array<i64: 2, 8, 128>}, {transform_indices = @transform_2, window_bounds = array<i64: 2, 8, 128>}, {transform_indices = @transform_3, window_bounds = array<i64: 1, 2, 128>}, {transform_indices = @transform_4, window_bounds = array<i64: 1, 2, 128>}, {transform_indices = @transform_5, window_bounds = array<i64: 1, 2, 128>}]} {
    %c0 = arith.constant 0 : index
    %c0_0 = arith.constant 0 : index
    %c0_1 = arith.constant 0 : index
    %0 = vector.load %arg3[%c0, %c0_0, %c0_1] : memref<2x8x128xf32, #tpu.memory_space<vmem>>, vector<2x8x128xf32>
    %c0_2 = arith.constant 0 : index
    %c0_3 = arith.constant 0 : index
    %c0_4 = arith.constant 0 : index
    %1 = vector.load %arg1[%c0_2, %c0_3, %c0_4] : memref<2x8x128xf32, #tpu.memory_space<vmem>>, vector<2x8x128xf32>
    %2 = arith.mulf %1, %0 : vector<2x8x128xf32>
    %c0_5 = arith.constant 0 : index
    %c0_6 = arith.constant 0 : index
    %c0_7 = arith.constant 0 : index
    %3 = vector.load %arg2[%c0_5, %c0_6, %c0_7] : memref<2x8x128xf32, #tpu.memory_space<vmem>>, vector<2x8x128xf32>
    %4 = arith.mulf %3, %0 : vector<2x8x128xf32>
    %5 = arith.mulf %2, %4 : vector<2x8x128xf32>
    %cst = arith.constant dense<0.000000e+00> : vector<2x128xf32>
    %6 = vector.multi_reduction <add>, %5, %cst [1] : vector<2x8x128xf32> to vector<2x128xf32>
    %7 = vector.shape_cast %6 : vector<2x128xf32> to vector<1x2x128xf32>
    %c0_8 = arith.constant 0 : index
    %c0_9 = arith.constant 0 : index
    %c0_10 = arith.constant 0 : index
    %8 = vector.load %arg4[%c0_8, %c0_9, %c0_10] : memref<1x2x128xf32, #tpu.memory_space<vmem>>, vector<1x2x128xf32>
    tpu.vector_store %arg4[%c0_8, %c0_9, %c0_10], %7 {strides = array<i32>} : memref<1x2x128xf32, #tpu.memory_space<vmem>>, vector<1x2x128xf32>,
    %9 = arith.mulf %2, %2 : vector<2x8x128xf32>
    %cst_11 = arith.constant dense<0.000000e+00> : vector<2x128xf32>
    %10 = vector.multi_reduction <add>, %9, %cst_11 [1] : vector<2x8x128xf32> to vector<2x128xf32>
    %11 = vector.shape_cast %10 : vector<2x128xf32> to vector<1x2x128xf32>
    %c0_12 = arith.constant 0 : index
    %c0_13 = arith.constant 0 : index
    %c0_14 = arith.constant 0 : index
    %12 = vector.load %arg5[%c0_12, %c0_13, %c0_14] : memref<1x2x128xf32, #tpu.memory_space<vmem>>, vector<1x2x128xf32>
    tpu.vector_store %arg5[%c0_12, %c0_13, %c0_14], %11 {strides = array<i32>} : memref<1x2x128xf32, #tpu.memory_space<vmem>>, vector<1x2x128xf32>,
    %13 = arith.mulf %4, %4 : vector<2x8x128xf32>
    %cst_15 = arith.constant dense<0.000000e+00> : vector<2x128xf32>
    %14 = vector.multi_reduction <add>, %13, %cst_15 [1] : vector<2x8x128xf32> to vector<2x128xf32>
    %15 = vector.shape_cast %14 : vector<2x128xf32> to vector<1x2x128xf32>
    %c0_16 = arith.constant 0 : index
    %c0_17 = arith.constant 0 : index
    %c0_18 = arith.constant 0 : index
    %16 = vector.load %arg6[%c0_16, %c0_17, %c0_18] : memref<1x2x128xf32, #tpu.memory_space<vmem>>, vector<1x2x128xf32>
    tpu.vector_store %arg6[%c0_16, %c0_17, %c0_18], %15 {strides = array<i32>} : memref<1x2x128xf32, #tpu.memory_space<vmem>>, vector<1x2x128xf32>,
    return
  }
  func.func @transform_0(%arg0: i32) -> (i32, i32, i32) {
    %c0_i32 = arith.constant 0 : i32
    %c0_i32_0 = arith.constant 0 : i32
    %c0_i32_1 = arith.constant 0 : i32
    return %c0_i32, %arg0, %c0_i32_0 : i32, i32, i32
  }
  func.func @transform_1(%arg0: i32) -> (i32, i32, i32) {
    %c0_i32 = arith.constant 0 : i32
    %c0_i32_0 = arith.constant 0 : i32
    %c0_i32_1 = arith.constant 0 : i32
    return %c0_i32, %arg0, %c0_i32_0 : i32, i32, i32
  }
  func.func @transform_2(%arg0: i32) -> (i32, i32, i32) {
    %c0_i32 = arith.constant 0 : i32
    %c0_i32_0 = arith.constant 0 : i32
    %c0_i32_1 = arith.constant 0 : i32
    return %c0_i32, %arg0, %c0_i32_0 : i32, i32, i32
  }
  func.func @transform_3(%arg0: i32) -> (i32, i32, i32) {
    %c0_i32 = arith.constant 0 : i32
    %c0_i32_0 = arith.constant 0 : i32
    %c0_i32_1 = arith.constant 0 : i32
    return %arg0, %c0_i32, %c0_i32_0 : i32, i32, i32
  }
  func.func @transform_4(%arg0: i32) -> (i32, i32, i32) {
    %c0_i32 = arith.constant 0 : i32
    %c0_i32_0 = arith.constant 0 : i32
    %c0_i32_1 = arith.constant 0 : i32
    return %arg0, %c0_i32, %c0_i32_0 : i32, i32, i32
  }
  func.func @transform_5(%arg0: i32) -> (i32, i32, i32) {
    %c0_i32 = arith.constant 0 : i32
    %c0_i32_0 = arith.constant 0 : i32
    %c0_i32_1 = arith.constant 0 : i32
    return %arg0, %c0_i32, %c0_i32_0 : i32, i32, i32
  }
}

</mosaic_0001>

<llo_original>
// kernel: tpu_custom_call.1
$region0: #{tpu_custom_call.1}
  #allocation0 [shape = 'u32[]', space=smem, size = 0x4, offset = 0x4, fixed_abs, tag = 'smem constant byte address 0x4 - core index']
  #allocation1 [shape = 'u32[72,128]{1,0:T(1,128)}', space=vmem, size = 0x9000, scoped, tag = 'internal scratch']
  %s0 = inlined_call_operand.hbm [shape: f32[2,8,128], index: 0, kind: input, shape index: {}]
  %s1 = inlined_call_operand.hbm [shape: f32[2,8,128], index: 1, kind: input, shape index: {}]
  %s2 = inlined_call_operand.hbm [shape: f32[2,8,128], index: 2, kind: input, shape index: {}]
  %s3 = inlined_call_operand.hbm [shape: f32[1,2,128], index: 3, kind: output, shape index: {0}]
  %s4 = inlined_call_operand.hbm [shape: f32[1,2,128], index: 4, kind: output, shape index: {1}]
  %s5 = inlined_call_operand.hbm [shape: f32[1,2,128], index: 5, kind: output, shape index: {2}]
  %6 = xla_tuple %s3, %s4, %s5
  %s7 = sld [smem:[#allocation0]]
  $region50: #{tpu_custom_call.1} parent=0
    _
  %s9 = ssub.s32 1, %s7
  %s10 = scalar_select 0, %s9, %s7
  $region1: #{tpu_custom_call.1} parent=0
    #allocation2 [shape = 'u8[8192]{0}', space=vmem, size = 0x2000, scoped, tag = 'input window, operand 0, single buffered']
    #allocation3 [shape = 's32[1]{0}', space=sflag, size = 0x4, scoped, tag = 'scoped memory for tpu_custom_call.1']
    #allocation4 [shape = 's32[1]{0}', space=sflag, size = 0x4, scoped, tag = 'scoped memory for tpu_custom_call.1']
    #allocation5 [shape = 'u8[8192]{0}', space=vmem, size = 0x2000, scoped, tag = 'input window, operand 1, single buffered']
    #allocation6 [shape = 's32[1]{0}', space=sflag, size = 0x4, scoped, tag = 'scoped memory for tpu_custom_call.1']
    #allocation7 [shape = 'u8[8192]{0}', space=vmem, size = 0x2000, scoped, tag = 'input window, operand 2, single buffered']
    #allocation8 [shape = 'u8[1024]{0}', space=vmem, size = 0x400, scoped, tag = 'output window, operand 0, single buffered']
    #allocation9 [shape = 'u8[1024]{0}', space=vmem, size = 0x400, scoped, tag = 'output window, operand 1, single buffered']
    #allocation10 [shape = 's32[1]{0}', space=sflag, size = 0x4, scoped, tag = 'scoped memory for tpu_custom_call.1']
    #allocation11 [shape = 'u8[1024]{0}', space=vmem, size = 0x400, scoped, tag = 'output window, operand 2, single buffered']
    %11 = vsyncpa [#allocation3], 0
    %12 = vsyncpa [#allocation6], 0
    %13 = vsyncpa [#allocation4], 0
    %14 = vsyncpa [#allocation10], 0
    // Predicated region
    $region2: #{tpu_custom_call.1} parent=1 // pred_check
      _
    $region3: #{tpu_custom_call.1} parent=1 // pred_check_branch
      %16 = sbr.rel (0) target = $region5
    $region4: #{tpu_custom_call.1} parent=1 // pred_region
      %18 = vsyncadd [#allocation3], 0
      %s19 = sshll.u32 %s0, 4
      %s20 = int_to_ptr.hbm [resolvable:$true] %s19
      %s21 = sshll.u32 [#allocation2], 4
      %s22 = int_to_ptr.vmem [resolvable:$true] %s21
      %27 = dma.hbm_to_vmem [thread:$0]  %s20, 256, %s22, [#allocation3], 128, 128, 8
    $region5: #{tpu_custom_call.1} parent=1 // pred_fallthru
      _
    // Predicated region
    $region6: #{tpu_custom_call.1} parent=1 // pred_check
      _
    $region7: #{tpu_custom_call.1} parent=1 // pred_check_branch
      %29 = sbr.rel (0) target = $region9
    $region8: #{tpu_custom_call.1} parent=1 // pred_region
      %31 = vsyncadd [#allocation6], 0
      %s32 = sshll.u32 %s1, 4
      %s33 = int_to_ptr.hbm [resolvable:$true] %s32
      %s34 = sshll.u32 [#allocation5], 4
      %s35 = int_to_ptr.vmem [resolvable:$true] %s34
      %40 = dma.hbm_to_vmem [thread:$0]  %s33, 256, %s35, [#allocation6], 128, 128, 8
    $region9: #{tpu_custom_call.1} parent=1 // pred_fallthru
      _
    // Predicated region
    $region10: #{tpu_custom_call.1} parent=1 // pred_check
      _
    $region11: #{tpu_custom_call.1} parent=1 // pred_check_branch
      %42 = sbr.rel (0) target = $region13
    $region12: #{tpu_custom_call.1} parent=1 // pred_region
      %44 = vsyncadd [#allocation6], 0
      %s45 = sshll.u32 %s2, 4
      %s46 = int_to_ptr.hbm [resolvable:$true] %s45
      %s47 = sshll.u32 [#allocation7], 4
      %s48 = int_to_ptr.vmem [resolvable:$true] %s47
      %53 = dma.hbm_to_vmem [thread:$0]  %s46, 256, %s48, [#allocation6], 128, 128, 8
    $region13: #{tpu_custom_call.1} parent=1 // pred_fallthru
      _
    // Predicated region
    $region14: #{tpu_custom_call.1} parent=1 // pred_check
      _
    $region15: #{tpu_custom_call.1} parent=1 // pred_check_branch
      %55 = sbr.rel (0) target = $region17
    $region16: #{tpu_custom_call.1} parent=1 // pred_region
      %57 = dma.done [#allocation3], 256
    $region17: #{tpu_custom_call.1} parent=1 // pred_fallthru
      _
    // Predicated region
    $region18: #{tpu_custom_call.1} parent=1 // pred_check
      _
    $region19: #{tpu_custom_call.1} parent=1 // pred_check_branch
      %59 = sbr.rel (0) target = $region21
    $region20: #{tpu_custom_call.1} parent=1 // pred_region
      %61 = dma.done [#allocation6], 256
    $region21: #{tpu_custom_call.1} parent=1 // pred_fallthru
      _
    // Predicated region
    $region22: #{tpu_custom_call.1} parent=1 // pred_check
      _
    $region23: #{tpu_custom_call.1} parent=1 // pred_check_branch
      %63 = sbr.rel (0) target = $region25
    $region24: #{tpu_custom_call.1} parent=1 // pred_region
      %65 = dma.done [#allocation6], 256
    $region25: #{tpu_custom_call.1} parent=1 // pred_fallthru
      _
    %v66 = vld [vmem:[#allocation7] sm:$0xff]
    %v67 = vld [vmem:[#allocation7 + $0x8] sm:$0xff]
    %v68 = vld [vmem:[#allocation2] sm:$0xff]
    %v69 = vld [vmem:[#allocation2 + $0x8] sm:$0xff]
    %v70 = vmul.f32 %v68, %v66
    %v71 = vmul.f32 %v69, %v67
    %v72 = vld [vmem:[#allocation5] sm:$0xff]
    %v73 = vld [vmem:[#allocation5 + $0x8] sm:$0xff]
    %v74 = vmul.f32 %v72, %v66
    %v75 = vmul.f32 %v73, %v67
    %v76 = vmul.f32 %v70, %v74
    %v77 = vmul.f32 %v71, %v75
    %v78 = vrot.slane %v76, 4
    %v79 = vadd.f32 %v76, %v78
    %v80 = vrot.slane %v79, 2
    %v81 = vadd.f32 %v79, %v80
    %v82 = vrot.slane %v81, 1
    %v83 = vadd.f32 %v81, %v82
    %v84 = vrot.slane %v77, 4
    %v85 = vadd.f32 %v77, %v84
    %v86 = vrot.slane %v85, 2
    %v87 = vadd.f32 %v85, %v86
    %v88 = vrot.slane %v87, 1
    %v89 = vadd.f32 %v87, %v88
    %vm92 = vcmask 1041409
    %v93 = vsel %vm92, %v89, %v83
    %95 = vst [vmem:[#allocation8] sm:$0x3] %v93
    %v96 = vmul.f32 %v70, %v70
    %v97 = vmul.f32 %v71, %v71
    %v98 = vrot.slane %v96, 4
    %v99 = vadd.f32 %v96, %v98
    %v100 = vrot.slane %v99, 2
    %v101 = vadd.f32 %v99, %v100
    %v102 = vrot.slane %v101, 1
    %v103 = vadd.f32 %v101, %v102
    %v104 = vrot.slane %v97, 4
    %v105 = vadd.f32 %v97, %v104
    %v106 = vrot.slane %v105, 2
    %v107 = vadd.f32 %v105, %v106
    %v108 = vrot.slane %v107, 1
    %v109 = vadd.f32 %v107, %v108
    %v112 = vsel %vm92, %v109, %v103
    %114 = vst [vmem:[#allocation9] sm:$0x3] %v112
    %v115 = vmul.f32 %v74, %v74
    %v116 = vmul.f32 %v75, %v75
    %v117 = vrot.slane %v115, 4
    %v118 = vadd.f32 %v115, %v117
    %v119 = vrot.slane %v118, 2
    %v120 = vadd.f32 %v118, %v119
    %v121 = vrot.slane %v120, 1
    %v122 = vadd.f32 %v120, %v121
    %v123 = vrot.slane %v116, 4
    %v124 = vadd.f32 %v116, %v123
    %v125 = vrot.slane %v124, 2
    %v126 = vadd.f32 %v124, %v125
    %v127 = vrot.slane %v126, 1
    %v128 = vadd.f32 %v126, %v127
    %v131 = vsel %vm92, %v128, %v122
    %133 = vst [vmem:[#allocation11] sm:$0x3] %v131
    // Predicated region
    $region26: #{tpu_custom_call.1} parent=1 // pred_check
      _
    $region27: #{tpu_custom_call.1} parent=1 // pred_check_branch
      %135 = sbr.rel (0) target = $region29
    $region28: #{tpu_custom_call.1} parent=1 // pred_region
      %137 = vsyncadd [#allocation4], 0
      %s139 = sshll.u32 [#allocation8], 4
      %s140 = int_to_ptr.vmem [resolvable:$true] %s139
      %s141 = sshll.u32 %s3, 4
      %s142 = int_to_ptr.hbm [resolvable:$true] %s141
      %144 = dma.vmem_to_hbm [thread:$0]  %s140, 32, %s142, [#allocation4]
    $region29: #{tpu_custom_call.1} parent=1 // pred_fallthru
      _
    // Predicated region
    $region30: #{tpu_custom_call.1} parent=1 // pred_check
      _
    $region31: #{tpu_custom_call.1} parent=1 // pred_check_branch
      %146 = sbr.rel (0) target = $region33
    $region32: #{tpu_custom_call.1} parent=1 // pred_region
      %148 = vsyncadd [#allocation10], 0
      %s150 = sshll.u32 [#allocation9], 4
      %s151 = int_to_ptr.vmem [resolvable:$true] %s150
      %s152 = sshll.u32 %s4, 4
      %s153 = int_to_ptr.hbm [resolvable:$true] %s152
      %155 = dma.vmem_to_hbm [thread:$0]  %s151, 32, %s153, [#allocation10]
    $region33: #{tpu_custom_call.1} parent=1 // pred_fallthru
      _
    // Predicated region
    $region34: #{tpu_custom_call.1} parent=1 // pred_check
      _
    $region35: #{tpu_custom_call.1} parent=1 // pred_check_branch
      %157 = sbr.rel (0) target = $region37
    $region36: #{tpu_custom_call.1} parent=1 // pred_region
      %159 = vsyncadd [#allocation10], 0
      %s161 = sshll.u32 [#allocation11], 4
      %s162 = int_to_ptr.vmem [resolvable:$true] %s161
      %s163 = sshll.u32 %s5, 4
      %s164 = int_to_ptr.hbm [resolvable:$true] %s163
      %166 = dma.vmem_to_hbm [thread:$0]  %s162, 32, %s164, [#allocation10]
    $region37: #{tpu_custom_call.1} parent=1 // pred_fallthru
      _
    // Predicated region
    $region38: #{tpu_custom_call.1} parent=1 // pred_check
      _
    $region39: #{tpu_custom_call.1} parent=1 // pred_check_branch
      %168 = sbr.rel (0) target = $region41
    $region40: #{tpu_custom_call.1} parent=1 // pred_region
      %170 = dma.done [#allocation4], 32
    $region41: #{tpu_custom_call.1} parent=1 // pred_fallthru
      _
    // Predicated region
    $region42: #{tpu_custom_call.1} parent=1 // pred_check
      _
    $region43: #{tpu_custom_call.1} parent=1 // pred_check_branch
      %172 = sbr.rel (0) target = $region45
    $region44: #{tpu_custom_call.1} parent=1 // pred_region
      %174 = dma.done [#allocation10], 32
    $region45: #{tpu_custom_call.1} parent=1 // pred_fallthru
      _
    // Predicated region
    $region46: #{tpu_custom_call.1} parent=1 // pred_check
      _
    $region47: #{tpu_custom_call.1} parent=1 // pred_check_branch
      %176 = sbr.rel (0) target = $region49
    $region48: #{tpu_custom_call.1} parent=1 // pred_region
      %178 = dma.done [#allocation10], 32
    $region49: #{tpu_custom_call.1} parent=1 // pred_fallthru
      _
    %179 = vsyncpa [#allocation3], 1
    %180 = vsyncpa [#allocation6], 1
    %181 = vsyncpa [#allocation4], 1
    %182 = vsyncpa [#allocation10], 1

</llo_original>
